<compile_context>
chip_gen: v7x
topology: tpu7x:2x2x1
jax: 0.10.0
libtpu: 0.0.40
codegen_flags: <defaults>
</compile_context>

<pallas_src>
import functools

import jax
import jax.numpy as jnp
from jax.experimental import pallas as pl
from jax.experimental.pallas import tpu as pltpu

LANE = 128     # vreg lane width (last dim)
SUBLANE = 8    # vreg sublane width (second-to-last dim)


def _round_up(n, m):
    return (n + m - 1) // m * m


def decoder_kernel(x_ref, w1_ref, b1_ref, w2_ref, b2_ref, w3_ref, b3_ref, o_ref):
    # fc1 + ReLU  (bias broadcast + ReLU fused on the VPU, f32 accumulation)
    h1 = jnp.dot(x_ref[...], w1_ref[...], preferred_element_type=jnp.float32)
    h1 = jnp.maximum(h1 + b1_ref[...], 0.0)
    # fc2 + ReLU
    h2 = jnp.dot(h1, w2_ref[...], preferred_element_type=jnp.float32)
    h2 = jnp.maximum(h2 + b2_ref[...], 0.0)
    # fc3 (no activation)
    out = jnp.dot(h2, w3_ref[...], preferred_element_type=jnp.float32)
    o_ref[...] = (out + b3_ref[...]).astype(o_ref.dtype)


def prepare_params(params):
    """Pad ONLY the hidden dim to a 128-lane multiple. Call once at init.

    Zero padding is exact: padded hidden columns get zero weight + zero bias
    (ReLU(0)=0) and padded w2/w3 rows contribute nothing. Input (L) and
    output (O) dims are left at native width -> no inflated HBM traffic.
    """
    w1, b1, w2, b2, w3, b3 = (params[k] for k in ("w1", "b1", "w2", "b2", "w3", "b3"))
    H = w1.shape[1]
    pad_h = _round_up(H, LANE) - H
    return {
        "w1": jnp.pad(w1, ((0, 0), (0, pad_h))),
        "b1": jnp.pad(b1, ((0, 0), (0, pad_h))),
        "w2": jnp.pad(w2, ((0, pad_h), (0, pad_h))),
        "b2": jnp.pad(b2, ((0, 0), (0, pad_h))),
        "w3": jnp.pad(w3, ((0, pad_h), (0, 0))),
        "b3": b3,
    }


@functools.partial(jax.jit, static_argnames=("block_batch",))
def decoder_forward(x, padded_params, *, block_batch=4096):
    """x: [..., latent_dim]. padded_params: output of prepare_params().

    All leading dims are flattened into one batch axis so a whole rollout
    ([T, n_agents, B, latent]) is processed in a single pallas_call.
    """
    w1, b1, w2, b2, w3, b3 = (
        padded_params[k] for k in ("w1", "b1", "w2", "b2", "w3", "b3"))
    L, Hp = w1.shape
    O = w3.shape[1]
    assert x.shape[-1] == L, (x.shape, L)

    lead = x.shape[:-1]
    x2 = x.reshape(-1, L)
    B = x2.shape[0]

    # Row tile: multiple of the 8-row sublane, capped by block_batch. When the
    # batch allows it, force >= 2 grid steps so "parallel" splits rows across
    # both v7x TensorCores. No HBM padding anywhere: the last partial block is
    # masked by Pallas automatically.
    tb_cap = max(_round_up(block_batch, SUBLANE), SUBLANE)
    target_blocks = max(2, pl.cdiv(B, tb_cap))
    TB = max(_round_up(pl.cdiv(B, target_blocks), SUBLANE), SUBLANE)
    TB = min(TB, tb_cap)
    num_blocks = pl.cdiv(B, TB)

    # Weights / biases: single full block, constant index_map -> VMEM-resident
    # across all grid steps. Activation / output tiles stride along the batch
    # and are software pipelined (double-buffered) by Pallas.
    resident = lambda shape: pl.BlockSpec(shape, lambda i: (0,) * len(shape))

    flops = 2 * B * (L * Hp + Hp * Hp + Hp * O)
    bytes_accessed = 4 * (B * (L + O) + L * Hp + Hp * Hp + Hp * O + 2 * Hp + O)

    out = pl.pallas_call(
        decoder_kernel,
        out_shape=jax.ShapeDtypeStruct((B, O), x.dtype),
        grid=(num_blocks,),
        in_specs=[
            pl.BlockSpec((TB, L), lambda i: (i, 0)),    # x tile (pipelined)
            resident((L, Hp)), resident((1, Hp)),       # fc1
            resident((Hp, Hp)), resident((1, Hp)),      # fc2
            resident((Hp, O)), resident((1, O)),        # fc3
        ],
        out_specs=pl.BlockSpec((TB, O), lambda i: (i, 0)),
        compiler_params=pltpu.CompilerParams(
            # Batch rows are independent: shard grid steps across both TCs on v7x.
            dimension_semantics=("parallel",),
        ),
        cost_estimate=pl.CostEstimate(
            flops=flops, transcendentals=0, bytes_accessed=bytes_accessed),
    )(x2, w1, b1, w2, b2, w3, b3)

    return out.reshape(lead + (O,))


def init_params(key, latent_dim, hidden_dim, output_dim):
    """Deterministic init mimicking nn.Linear (uniform(-1/sqrt(fan_in), +1/sqrt(fan_in)))."""
    ks = jax.random.split(key, 6)

    def linear(kw, kb, fan_in, fan_out):
        bound = 1.0 / jnp.sqrt(fan_in)
        w = jax.random.uniform(kw, (fan_in, fan_out), jnp.float32, -bound, bound)
        b = jax.random.uniform(kb, (1, fan_out), jnp.float32, -bound, bound)
        return w, b

    w1, b1 = linear(ks[0], ks[1], latent_dim, hidden_dim)
    w2, b2 = linear(ks[2], ks[3], hidden_dim, hidden_dim)
    w3, b3 = linear(ks[4], ks[5], hidden_dim, output_dim)
    return {"w1": w1, "b1": b1, "w2": w2, "b2": b2, "w3": w3, "b3": b3}


def decoder_ref(x, p):
    h1 = jnp.maximum(x @ p["w1"] + p["b1"], 0.0)
    h2 = jnp.maximum(h1 @ p["w2"] + p["b2"], 0.0)
    return h2 @ p["w3"] + p["b3"]


if __name__ == "__main__":
    key = jax.random.PRNGKey(0)
    latent_dim, hidden_dim, output_dim = 8, 32, 16
    batch = 300  # not a tile multiple -> exercises the masked partial last block

    kx, kp = jax.random.split(key)
    x = jax.random.normal(kx, (batch, latent_dim), jnp.float32)
    params = init_params(kp, latent_dim, hidden_dim, output_dim)
    padded_params = prepare_params(params)   # pad hidden dim once, outside the hot path

    # block_batch=128 forces a multi-step batch grid even at this small test
    # size; production callers can leave the 4096-row default.
    out = decoder_forward(x, padded_params, block_batch=128)
    out = jax.block_until_ready(out)

    ref = decoder_ref(x, params)
    assert out.shape == (batch, output_dim), out.shape
    assert jnp.allclose(out, ref, atol=1e-4, rtol=1e-4), "mismatch vs reference"
    print("KERNEL_OK")
</pallas_src>

<mosaic_0001>
module attributes {stable_mosaic.version = 11 : i64} {
  func.func @decoder_kernel(%arg0: i32, %arg1: memref<104x8xf32, #tpu.memory_space<vmem>>, %arg2: memref<8x128xf32, #tpu.memory_space<vmem>>, %arg3: memref<1x128xf32, #tpu.memory_space<vmem>>, %arg4: memref<128x128xf32, #tpu.memory_space<vmem>>, %arg5: memref<1x128xf32, #tpu.memory_space<vmem>>, %arg6: memref<128x16xf32, #tpu.memory_space<vmem>>, %arg7: memref<1x16xf32, #tpu.memory_space<vmem>>, %arg8: memref<104x16xf32, #tpu.memory_space<vmem>>) attributes {dimension_semantics = [#tpu.dimension_semantics<parallel>], iteration_bounds = array<i64: 3>, scalar_prefetch = 0 : i64, scratch_operands = 0 : i64, tpu.core_type = #tpu.core_type<tc>, window_params = [{transform_indices = @transform_0, window_bounds = array<i64: 104, 8>}, {pipeline_mode = #tpu.pipeline_mode<synchronous>, transform_indices = @transform_1, window_bounds = array<i64: 8, 128>}, {pipeline_mode = #tpu.pipeline_mode<synchronous>, transform_indices = @transform_2, window_bounds = array<i64: 1, 128>}, {pipeline_mode = #tpu.pipeline_mode<synchronous>, transform_indices = @transform_3, window_bounds = array<i64: 128, 128>}, {pipeline_mode = #tpu.pipeline_mode<synchronous>, transform_indices = @transform_4, window_bounds = array<i64: 1, 128>}, {pipeline_mode = #tpu.pipeline_mode<synchronous>, transform_indices = @transform_5, window_bounds = array<i64: 128, 16>}, {pipeline_mode = #tpu.pipeline_mode<synchronous>, transform_indices = @transform_6, window_bounds = array<i64: 1, 16>}, {transform_indices = @transform_7, window_bounds = array<i64: 104, 16>}]} {
    %c0 = arith.constant 0 : index
    %c0_0 = arith.constant 0 : index
    %0 = vector.load %arg1[%c0, %c0_0] : memref<104x8xf32, #tpu.memory_space<vmem>>, vector<104x8xf32>
    %c0_1 = arith.constant 0 : index
    %c0_2 = arith.constant 0 : index
    %1 = vector.load %arg2[%c0_1, %c0_2] : memref<8x128xf32, #tpu.memory_space<vmem>>, vector<8x128xf32>
    %cst = arith.constant dense<0.000000e+00> : vector<104x128xf32>
    %2 = tpu.matmul %0, %1, %cst {dimension_numbers = #tpu.dot_dimension_numbers<[1], [0], [0], [1], [0, 0, 1, 1], [], []>} : vector<104x8xf32>, vector<8x128xf32>, vector<104x128xf32> -> vector<104x128xf32>
    %c0_3 = arith.constant 0 : index
    %c0_4 = arith.constant 0 : index
    %3 = vector.load %arg3[%c0_3, %c0_4] : memref<1x128xf32, #tpu.memory_space<vmem>>, vector<1x128xf32>
    %4 = vector.broadcast %3 : vector<1x128xf32> to vector<104x128xf32>
    %5 = arith.addf %2, %4 : vector<104x128xf32>
    %cst_5 = arith.constant 0.000000e+00 : f32
    %6 = vector.broadcast %cst_5 : f32 to vector<104x128xf32>
    %7 = arith.maximumf %5, %6 : vector<104x128xf32>
    %c0_6 = arith.constant 0 : index
    %c0_7 = arith.constant 0 : index
    %8 = vector.load %arg4[%c0_6, %c0_7] : memref<128x128xf32, #tpu.memory_space<vmem>>, vector<128x128xf32>
    %cst_8 = arith.constant dense<0.000000e+00> : vector<104x128xf32>
    %9 = tpu.matmul %7, %8, %cst_8 {dimension_numbers = #tpu.dot_dimension_numbers<[1], [0], [0], [1], [0, 0, 1, 1], [], []>} : vector<104x128xf32>, vector<128x128xf32>, vector<104x128xf32> -> vector<104x128xf32>
    %c0_9 = arith.constant 0 : index
    %c0_10 = arith.constant 0 : index
    %10 = vector.load %arg5[%c0_9, %c0_10] : memref<1x128xf32, #tpu.memory_space<vmem>>, vector<1x128xf32>
    %11 = vector.broadcast %10 : vector<1x128xf32> to vector<104x128xf32>
    %12 = arith.addf %9, %11 : vector<104x128xf32>
    %cst_11 = arith.constant 0.000000e+00 : f32
    %13 = vector.broadcast %cst_11 : f32 to vector<104x128xf32>
    %14 = arith.maximumf %12, %13 : vector<104x128xf32>
    %c0_12 = arith.constant 0 : index
    %c0_13 = arith.constant 0 : index
    %15 = vector.load %arg6[%c0_12, %c0_13] : memref<128x16xf32, #tpu.memory_space<vmem>>, vector<128x16xf32>
    %cst_14 = arith.constant dense<0.000000e+00> : vector<104x16xf32>
    %16 = tpu.matmul %14, %15, %cst_14 {dimension_numbers = #tpu.dot_dimension_numbers<[1], [0], [0], [1], [0, 0, 1, 1], [], []>} : vector<104x128xf32>, vector<128x16xf32>, vector<104x16xf32> -> vector<104x16xf32>
    %c0_15 = arith.constant 0 : index
    %c0_16 = arith.constant 0 : index
    %17 = vector.load %arg7[%c0_15, %c0_16] : memref<1x16xf32, #tpu.memory_space<vmem>>, vector<1x16xf32>
    %18 = vector.broadcast %17 : vector<1x16xf32> to vector<104x16xf32>
    %19 = arith.addf %16, %18 : vector<104x16xf32>
    %c0_17 = arith.constant 0 : index
    %c0_18 = arith.constant 0 : index
    %20 = vector.load %arg8[%c0_17, %c0_18] : memref<104x16xf32, #tpu.memory_space<vmem>>, vector<104x16xf32>
    tpu.vector_store %arg8[%c0_17, %c0_18], %19 {strides = array<i32>} : memref<104x16xf32, #tpu.memory_space<vmem>>, vector<104x16xf32>,
    return
  }
  func.func @transform_0(%arg0: i32) -> (i32, i32) {
    %c0_i32 = arith.constant 0 : i32
    %c0_i32_0 = arith.constant 0 : i32
    return %arg0, %c0_i32 : i32, i32
  }
  func.func @transform_1(%arg0: i32) -> (i32, i32) {
    %c0_i32 = arith.constant 0 : i32
    %c0_i32_0 = arith.constant 0 : i32
    %c0_i32_1 = arith.constant 0 : i32
    return %c0_i32, %c0_i32_0 : i32, i32
  }
  func.func @transform_2(%arg0: i32) -> (i32, i32) {
    %c0_i32 = arith.constant 0 : i32
    %c0_i32_0 = arith.constant 0 : i32
    %c0_i32_1 = arith.constant 0 : i32
    return %c0_i32, %c0_i32_0 : i32, i32
  }
  func.func @transform_3(%arg0: i32) -> (i32, i32) {
    %c0_i32 = arith.constant 0 : i32
    %c0_i32_0 = arith.constant 0 : i32
    %c0_i32_1 = arith.constant 0 : i32
    return %c0_i32, %c0_i32_0 : i32, i32
  }
  func.func @transform_4(%arg0: i32) -> (i32, i32) {
    %c0_i32 = arith.constant 0 : i32
    %c0_i32_0 = arith.constant 0 : i32
    %c0_i32_1 = arith.constant 0 : i32
    return %c0_i32, %c0_i32_0 : i32, i32
  }
  func.func @transform_5(%arg0: i32) -> (i32, i32) {
    %c0_i32 = arith.constant 0 : i32
    %c0_i32_0 = arith.constant 0 : i32
    %c0_i32_1 = arith.constant 0 : i32
    return %c0_i32, %c0_i32_0 : i32, i32
  }
  func.func @transform_6(%arg0: i32) -> (i32, i32) {
    %c0_i32 = arith.constant 0 : i32
    %c0_i32_0 = arith.constant 0 : i32
    %c0_i32_1 = arith.constant 0 : i32
    return %c0_i32, %c0_i32_0 : i32, i32
  }
  func.func @transform_7(%arg0: i32) -> (i32, i32) {
    %c0_i32 = arith.constant 0 : i32
    %c0_i32_0 = arith.constant 0 : i32
    return %arg0, %c0_i32 : i32, i32
  }
}

</mosaic_0001>

<llo_original>
// kernel: decoder_forward.1
$region0: #{decoder_forward.1}
  #allocation0 [shape = 'u32[]', space=smem, size = 0x4, offset = 0x4, fixed_abs, tag = 'smem constant byte address 0x4 - core index']
  #allocation1 [shape = 'u32[144,128]{1,0:T(1,128)}', space=vmem, size = 0x12000, scoped, tag = 'internal scratch']
  %s0 = inlined_call_operand.vmem [shape: f32[300,8], index: 0, kind: input, shape index: {}]
  %s1 = inlined_call_operand.vmem [shape: f32[8,128], index: 1, kind: input, shape index: {}]
  %s2 = inlined_call_operand.vmem [shape: f32[1,128], index: 2, kind: input, shape index: {}]
  %s3 = inlined_call_operand.vmem [shape: f32[128,128], index: 3, kind: input, shape index: {}]
  %s4 = inlined_call_operand.vmem [shape: f32[1,128], index: 4, kind: input, shape index: {}]
  %s5 = inlined_call_operand.vmem [shape: f32[128,16], index: 5, kind: input, shape index: {}]
  %s6 = inlined_call_operand.vmem [shape: f32[1,16], index: 6, kind: input, shape index: {}]
  %s7 = inlined_call_operand.vmem [shape: f32[300,16], index: 7, kind: output, shape index: {}]
  %s8 = sld [smem:[#allocation0]]
  $region109: #{decoder_forward.1} parent=0
    _
  %s10 = ssub.s32 1, %s8
  %s11 = scalar_select 0, %s10, %s8
  $region1: #{decoder_forward.1} parent=0
    #allocation2 [shape = 'u8[106496]{0}', space=vmem, size = 0x1a000, scoped, tag = 'output window, operand 0']
    loop: start=0, step=1, limit=5
    $region2: #{decoder_forward.1} parent=1 // loop_pre_header
      _
    $region3: #{decoder_forward.1} parent=1 // loop_header
      %s13 = sphi 0, %s17
      %p14 = scmp.ge.s32.totalorder %s13, 5
      %s23 = sphi 0, %s25
      %s26 = sphi 0, %s23
      %s27 = sphi 0, %s26
      %s43 = sphi 0, %s27
      %s47 = sphi 0, %s47
      %s49 = sphi 0, %s47
      %s50 = sphi 0, %s49
      %s64 = sphi 0, %s50
      %s68 = sphi 0, %s68
      %s70 = sphi 0, %s68
      %s71 = sphi 0, %s70
      %s85 = sphi 0, %s71
      %s89 = sphi 0, %s89
      %s91 = sphi 0, %s89
      %s92 = sphi 0, %s91
      %s106 = sphi 0, %s92
      %s110 = sphi 0, %s110
      %s112 = sphi 0, %s110
      %s113 = sphi 0, %s112
      %s127 = sphi 0, %s113
      %s131 = sphi 0, %s131
      %s133 = sphi 0, %s131
      %s134 = sphi 0, %s133
      %s148 = sphi 0, %s134
      %s152 = sphi 0, %s152
      %s154 = sphi 0, %s152
      %s155 = sphi 0, %s154
      %s169 = sphi 0, %s155
      %s175 = sphi 0, %s177
      %s178 = sphi 0, %s175
      %s179 = sphi 0, %s178
      %s195 = sphi 0, %s179
    $region4: #{decoder_forward.1} parent=1 // loop_header_branch
      %16 = sbr.rel (%p14) target = $region8
    $region5: #{decoder_forward.1} parent=1 // loop_body
      %s18 = ssub.s32 %s13, 1
      %s19 = ssub.s32 %s13, 2
      %s20 = sadd.s32 %s13, 1
      %s21 = ssub.s32 %s13, %s20
      %p22 = scmp.eq.s32.totalorder %s21, 0
      %s24 = sadd.s32 %s23, 1
      %s25 = scalar_select %p22, %s23, %s24
      %p28 = pneg %p22
      %p29 = scmp.eq.s32.totalorder %s13, 2
      %p30 = por %p28, %p29
      %p31 = scmp.ne.s32.totalorder %s23, %s26
      %p32 = scmp.eq.s32.totalorder %s13, 0
      %p33 = por %p31, %p32
      %p34 = scmp.ne.s32.totalorder %s23, %s26
      %p35 = scmp.eq.s32.totalorder %s18, 2
      %p36 = por %p34, %p35
      %p37 = scmp.ne.s32.totalorder %s26, %s27
      %p38 = scmp.eq.s32.totalorder %s18, 0
      %p39 = por %p37, %p38
      %p40 = scmp.ne.s32.totalorder %s26, %s27
      %p41 = scmp.eq.s32.totalorder %s19, 2
      %p42 = por %p40, %p41
      %p44 = scmp.ne.s32.totalorder %s27, %s43
      %p45 = scmp.eq.s32.totalorder %s19, 0
      %p46 = por %p44, %p45
      %s48 = sadd.s32 %s47, 1
      %p51 = scmp.eq.s32.totalorder %s13, 2
      %p52 = scmp.ne.s32.totalorder %s47, %s49
      %p53 = scmp.eq.s32.totalorder %s13, 0
      %p54 = por %p52, %p53
      %p55 = scmp.ne.s32.totalorder %s47, %s49
      %p56 = scmp.eq.s32.totalorder %s18, 2
      %p57 = por %p55, %p56
      %p58 = scmp.ne.s32.totalorder %s49, %s50
      %p59 = scmp.eq.s32.totalorder %s18, 0
      %p60 = por %p58, %p59
      %p61 = scmp.ne.s32.totalorder %s49, %s50
      %p62 = scmp.eq.s32.totalorder %s19, 2
      %p63 = por %p61, %p62
      %p65 = scmp.ne.s32.totalorder %s50, %s64
      %p66 = scmp.eq.s32.totalorder %s19, 0
      %p67 = por %p65, %p66
      %s69 = sadd.s32 %s68, 1
      %p72 = scmp.eq.s32.totalorder %s13, 2
      %p73 = scmp.ne.s32.totalorder %s68, %s70
      %p74 = scmp.eq.s32.totalorder %s13, 0
      %p75 = por %p73, %p74
      %p76 = scmp.ne.s32.totalorder %s68, %s70
      %p77 = scmp.eq.s32.totalorder %s18, 2
      %p78 = por %p76, %p77
      %p79 = scmp.ne.s32.totalorder %s70, %s71
      %p80 = scmp.eq.s32.totalorder %s18, 0
      %p81 = por %p79, %p80
      %p82 = scmp.ne.s32.totalorder %s70, %s71
      %p83 = scmp.eq.s32.totalorder %s19, 2
      %p84 = por %p82, %p83
      %p86 = scmp.ne.s32.totalorder %s71, %s85
      %p87 = scmp.eq.s32.totalorder %s19, 0
      %p88 = por %p86, %p87
      %s90 = sadd.s32 %s89, 1
      %p93 = scmp.eq.s32.totalorder %s13, 2
      %p94 = scmp.ne.s32.totalorder %s89, %s91
      %p95 = scmp.eq.s32.totalorder %s13, 0
      %p96 = por %p94, %p95
      %p97 = scmp.ne.s32.totalorder %s89, %s91
      %p98 = scmp.eq.s32.totalorder %s18, 2
      %p99 = por %p97, %p98
      %p100 = scmp.ne.s32.totalorder %s91, %s92
      %p101 = scmp.eq.s32.totalorder %s18, 0
      %p102 = por %p100, %p101
      %p103 = scmp.ne.s32.totalorder %s91, %s92
      %p104 = scmp.eq.s32.totalorder %s19, 2
      %p105 = por %p103, %p104
      %p107 = scmp.ne.s32.totalorder %s92, %s106
      %p108 = scmp.eq.s32.totalorder %s19, 0
      %p109 = por %p107, %p108
      %s111 = sadd.s32 %s110, 1
      %p114 = scmp.eq.s32.totalorder %s13, 2
      %p115 = scmp.ne.s32.totalorder %s110, %s112
      %p116 = scmp.eq.s32.totalorder %s13, 0
      %p117 = por %p115, %p116
      %p118 = scmp.ne.s32.totalorder %s110, %s112
      %p119 = scmp.eq.s32.totalorder %s18, 2
      %p120 = por %p118, %p119
      %p121 = scmp.ne.s32.totalorder %s112, %s113
      %p122 = scmp.eq.s32.totalorder %s18, 0
      %p123 = por %p121, %p122
      %p124 = scmp.ne.s32.totalorder %s112, %s113
      %p125 = scmp.eq.s32.totalorder %s19, 2
      %p126 = por %p124, %p125
      %p128 = scmp.ne.s32.totalorder %s113, %s127
      %p129 = scmp.eq.s32.totalorder %s19, 0
      %p130 = por %p128, %p129
      %s132 = sadd.s32 %s131, 1
      %p135 = scmp.eq.s32.totalorder %s13, 2
      %p136 = scmp.ne.s32.totalorder %s131, %s133
      %p137 = scmp.eq.s32.totalorder %s13, 0
      %p138 = por %p136, %p137
      %p139 = scmp.ne.s32.totalorder %s131, %s133
      %p140 = scmp.eq.s32.totalorder %s18, 2
      %p141 = por %p139, %p140
      %p142 = scmp.ne.s32.totalorder %s133, %s134
      %p143 = scmp.eq.s32.totalorder %s18, 0
      %p144 = por %p142, %p143
      %p145 = scmp.ne.s32.totalorder %s133, %s134
      %p146 = scmp.eq.s32.totalorder %s19, 2
      %p147 = por %p145, %p146
      %p149 = scmp.ne.s32.totalorder %s134, %s148
      %p150 = scmp.eq.s32.totalorder %s19, 0
      %p151 = por %p149, %p150
      %s153 = sadd.s32 %s152, 1
      %p156 = scmp.eq.s32.totalorder %s13, 2
      %p157 = scmp.ne.s32.totalorder %s152, %s154
      %p158 = scmp.eq.s32.totalorder %s13, 0
      %p159 = por %p157, %p158
      %p160 = scmp.ne.s32.totalorder %s152, %s154
      %p161 = scmp.eq.s32.totalorder %s18, 2
      %p162 = por %p160, %p161
      %p163 = scmp.ne.s32.totalorder %s154, %s155
      %p164 = scmp.eq.s32.totalorder %s18, 0
      %p165 = por %p163, %p164
      %p166 = scmp.ne.s32.totalorder %s154, %s155
      %p167 = scmp.eq.s32.totalorder %s19, 2
      %p168 = por %p166, %p167
      %p170 = scmp.ne.s32.totalorder %s155, %s169
      %p171 = scmp.eq.s32.totalorder %s19, 0
      %p172 = por %p170, %p171
      %s173 = ssub.s32 %s13, %s20
      %p174 = scmp.eq.s32.totalorder %s173, 0
      %s176 = sadd.s32 %s175, 1
      %s177 = scalar_select %p174, %s175, %s176
      %p180 = pneg %p174
      %p181 = scmp.eq.s32.totalorder %s13, 2
      %p182 = por %p180, %p181
      %p183 = scmp.ne.s32.totalorder %s175, %s178
      %p184 = scmp.eq.s32.totalorder %s13, 0
      %p185 = por %p183, %p184
      %p186 = scmp.ne.s32.totalorder %s175, %s178
      %p187 = scmp.eq.s32.totalorder %s18, 2
      %p188 = por %p186, %p187
      %p189 = scmp.ne.s32.totalorder %s178, %s179
      %p190 = scmp.eq.s32.totalorder %s18, 0
      %p191 = por %p189, %p190
      %p192 = scmp.ne.s32.totalorder %s178, %s179
      %p193 = scmp.eq.s32.totalorder %s19, 2
      %p194 = por %p192, %p193
      %p196 = scmp.ne.s32.totalorder %s179, %s195
      %p197 = scmp.eq.s32.totalorder %s19, 0
      %p198 = por %p196, %p197
      %p199 = scmp.le.s32.totalorder 1, %s13
      %p200 = scmp.lt.s32.totalorder %s13, 4
      %p201 = pnand %p199, %p200
      %p202 = pneg %p201
      // Predicated region
      $region9: #{decoder_forward.1} parent=5 // pred_check
        _
      $region10: #{decoder_forward.1} parent=5 // pred_check_branch
        %204 = sbr.rel (%p201) target = $region12
      $region11: #{decoder_forward.1} parent=5 // pred_region
        %s205 = ssub.s32 %s13, 1
        // Predicated region
        $region13: #{decoder_forward.1} parent=11 // pred_check
          %p206 = pneg %p60
        $region14: #{decoder_forward.1} parent=11 // pred_check_branch
          %208 = sbr.rel (%p206) target = $region16
        $region15: #{decoder_forward.1} parent=11 // pred_region
          _
        $region16: #{decoder_forward.1} parent=11 // pred_fallthru
          _
        // Predicated region
        $region17: #{decoder_forward.1} parent=11 // pred_check
          %p209 = pneg %p81
        $region18: #{decoder_forward.1} parent=11 // pred_check_branch
          %211 = sbr.rel (%p209) target = $region20
        $region19: #{decoder_forward.1} parent=11 // pred_region
          _
        $region20: #{decoder_forward.1} parent=11 // pred_fallthru
          _
        // Predicated region
        $region21: #{decoder_forward.1} parent=11 // pred_check
          %p212 = pneg %p102
        $region22: #{decoder_forward.1} parent=11 // pred_check_branch
          %214 = sbr.rel (%p212) target = $region24
        $region23: #{decoder_forward.1} parent=11 // pred_region
          _
        $region24: #{decoder_forward.1} parent=11 // pred_fallthru
          _
        // Predicated region
        $region25: #{decoder_forward.1} parent=11 // pred_check
          %p215 = pneg %p123
        $region26: #{decoder_forward.1} parent=11 // pred_check_branch
          %217 = sbr.rel (%p215) target = $region28
        $region27: #{decoder_forward.1} parent=11 // pred_region
          _
        $region28: #{decoder_forward.1} parent=11 // pred_fallthru
          _
        // Predicated region
        $region29: #{decoder_forward.1} parent=11 // pred_check
          %p218 = pneg %p144
        $region30: #{decoder_forward.1} parent=11 // pred_check_branch
          %220 = sbr.rel (%p218) target = $region32
        $region31: #{decoder_forward.1} parent=11 // pred_region
          _
        $region32: #{decoder_forward.1} parent=11 // pred_fallthru
          _
        // Predicated region
        $region33: #{decoder_forward.1} parent=11 // pred_check
          %p221 = pneg %p165
        $region34: #{decoder_forward.1} parent=11 // pred_check_branch
          %223 = sbr.rel (%p221) target = $region36
        $region35: #{decoder_forward.1} parent=11 // pred_region
          _
        $region36: #{decoder_forward.1} parent=11 // pred_fallthru
          _
      $region12: #{decoder_forward.1} parent=5 // pred_fallthru
        _
      %p224 = scmp.lt.s32.totalorder %s13, 3
      // Predicated region
      $region37: #{decoder_forward.1} parent=5 // pred_check
        %p225 = pneg %p224
      $region38: #{decoder_forward.1} parent=5 // pred_check_branch
        %227 = sbr.rel (%p225) target = $region40
      $region39: #{decoder_forward.1} parent=5 // pred_region
        // Predicated region
        $region41: #{decoder_forward.1} parent=39 // pred_check
          %p228 = pneg %p33
        $region42: #{decoder_forward.1} parent=39 // pred_check_branch
          %230 = sbr.rel (%p228) target = $region44
        $region43: #{decoder_forward.1} parent=39 // pred_region
          %s231 = smul.u32 13, %s13
          %s232 = ssub.s32 38, %s231
          %p233 = scmp.lt.s32.totalorder %s232, 13
          %s234 = scalar_select %p233, %s232, 13
          %s235 = smul.u32 128, %s234
          %p236 = scmp.lt.s32.totalorder %s231, 37
          %s237 = scalar_select %p236, %s231, 37
          %s238 = smul.addr %s237, 8
          %s239 = scalar_lea.vmem %s0, %s238
          %s240 = smul.u32 13, %s13
          %s241 = ssub.s32 38, %s240
          %p242 = scmp.lt.s32.totalorder %s241, 13
          %s243 = scalar_select %p242, %s241, 13
          %s244 = smul.u32 128, %s243
        $region44: #{decoder_forward.1} parent=39 // pred_fallthru
          _
      $region40: #{decoder_forward.1} parent=5 // pred_fallthru
        _
      %p245 = scmp.le.s32.totalorder 1, %s13
      %p246 = scmp.lt.s32.totalorder %s13, 4
      %p247 = pnand %p245, %p246
      %p248 = pneg %p247
      // Predicated region
      $region45: #{decoder_forward.1} parent=5 // pred_check
        _
      $region46: #{decoder_forward.1} parent=5 // pred_check_branch
        %250 = sbr.rel (%p247) target = $region48
      $region47: #{decoder_forward.1} parent=5 // pred_region
        %s251 = ssub.s32 %s13, 1
        %s252 = smul.u32 13, %s18
        %s253 = ssub.s32 38, %s252
        %p254 = scmp.lt.s32.totalorder %s253, 13
        %s255 = scalar_select %p254, %s253, 13
        %s256 = smul.u32 128, %s255
        %p257 = scmp.lt.s32.totalorder %s252, 37
        %s258 = scalar_select %p257, %s252, 37
        %s259 = smul.addr %s258, 8
        %s260 = scalar_lea.vmem %s0, %s259
        %p261 = pneg %p39
        %p262 = pneg %p36
        %p263 = pneg %p60
        %p264 = pneg %p57
        %p265 = pneg %p81
        %p266 = pneg %p78
        %p267 = pneg %p102
        %p268 = pneg %p99
        %p269 = pneg %p123
        %p270 = pneg %p120
        %p271 = pneg %p144
        %p272 = pneg %p141
        %p273 = pneg %p165
        %p274 = pneg %p162
        %p275 = pneg %p191
        %p276 = pneg %p188
        %s277 = sand.u32 %s178, 1
        %s278 = sand.u32 %s178, 1
        %s279 = smul.addr %s278, 104
        %s280 = scalar_lea.vmem [#allocation2], %s279
        %s281 = smul.u32 13, %s18
        %s282 = ssub.s32 38, %s281
        %p283 = scmp.lt.s32.totalorder %s282, 13
        %s284 = scalar_select %p283, %s282, 13
        %s285 = smul.u32 128, %s284
        %p286 = scmp.lt.s32.totalorder %s281, 37
        %s287 = scalar_select %p286, %s281, 37
        %s288 = smul.addr %s287, 8
        %s289 = scalar_lea.vmem %s0, %s288
        %s290 = smul.u32 13, %s18
        %s291 = ssub.s32 38, %s290
        %p292 = scmp.lt.s32.totalorder %s291, 13
        %s293 = scalar_select %p292, %s291, 13
        %s294 = smul.u32 128, %s293
        %s295 = smul.u32 13, %s18
        %s296 = ssub.s32 38, %s295
        %p297 = scmp.lt.s32.totalorder %s296, 13
        %s298 = scalar_select %p297, %s296, 13
        %s299 = smul.u32 128, %s298
        %v300 = vld [vmem:[%s289] sm:$0xff]
        %v301 = vld [vmem:[%s289 + $0x8] sm:$0xff]
        %v302 = vld [vmem:[%s289 + $0x10] sm:$0xff]
        %v303 = vld [vmem:[%s289 + $0x18] sm:$0xff]
        %v304 = vld [vmem:[%s289 + $0x20] sm:$0xff]
        %v305 = vld [vmem:[%s289 + $0x28] sm:$0xff]
        %v306 = vld [vmem:[%s289 + $0x30] sm:$0xff]
        %v307 = vld [vmem:[%s289 + $0x38] sm:$0xff]
        %v308 = vld [vmem:[%s289 + $0x40] sm:$0xff]
        %v309 = vld [vmem:[%s289 + $0x48] sm:$0xff]
        %v310 = vld [vmem:[%s289 + $0x50] sm:$0xff]
        %v311 = vld [vmem:[%s289 + $0x58] sm:$0xff]
        %v312 = vld [vmem:[%s289 + $0x60] sm:$0xff]
        %v313 = vld [vmem:[%s1] sm:$0xff]
        %v314 = vld [vmem:[%s2] sm:$0x1]
        %v316 = vlaneseq
        %v317 = vshrl.u32 %v316, 7
        %v318 = vsub.s32 0, %v317
        %v319 = vrot.slane %v314, %v318
        %vm321 = vcmask 64512
        %v323 = vsel %vm321, %v300, 0
        %v326 = vsel %vm321, %v301, 0
        %v329 = vsel %vm321, %v302, 0
        %v332 = vsel %vm321, %v303, 0
        %v335 = vsel %vm321, %v304, 0
        %v338 = vsel %vm321, %v305, 0
        %v341 = vsel %vm321, %v306, 0
        %v344 = vsel %vm321, %v307, 0
        %v347 = vsel %vm321, %v308, 0
        %v350 = vsel %vm321, %v309, 0
        %v353 = vsel %vm321, %v310, 0
        %v356 = vsel %vm321, %v311, 0
        %v359 = vsel %vm321, %v312, 0
        %361 = vmatprep.subr.mxu0 0.0
        %362 = vmatpush1.msra.mxu0 %v313
        %363 = vmatprep.subr.mxu0 0.0
        %364 = vmatpush1.msra.mxu0 0.0
        %365 = vmatprep.subr.mxu0 0.0
        %366 = vmatpush1.msra.mxu0 0.0
        %367 = vmatprep.subr.mxu0 0.0
        %368 = vmatpush1.msra.mxu0 0.0
        %369 = vmatprep.subr.mxu0 0.0
        %370 = vmatpush1.msra.mxu0 0.0
        %371 = vmatprep.subr.mxu0 0.0
        %372 = vmatpush1.msra.mxu0 0.0
        %373 = vmatprep.subr.mxu0 0.0
        %374 = vmatpush1.msra.mxu0 0.0
        %375 = vmatprep.subr.mxu0 0.0
        %376 = vmatpush1.msra.mxu0 0.0
        %377 = vmatprep.subr.mxu0 0.0
        %378 = vmatpush1.msra.mxu0 0.0
        %379 = vmatprep.subr.mxu0 0.0
        %380 = vmatpush1.msra.mxu0 0.0
        %381 = vmatprep.subr.mxu0 0.0
        %382 = vmatpush1.msra.mxu0 0.0
        %383 = vmatprep.subr.mxu0 0.0
        %384 = vmatpush1.msra.mxu0 0.0
        %385 = vmatprep.subr.mxu0 0.0
        %386 = vmatpush1.msra.mxu0 0.0
        %387 = vmatprep.subr.mxu0 0.0
        %388 = vmatpush1.msra.mxu0 0.0
        %389 = vmatprep.subr.mxu0 0.0
        %390 = vmatpush1.msra.mxu0 0.0
        %391 = vmatprep.subr.mxu0 0.0
        %392 = vmatpush1.msra.mxu0 0.0
        %393 = vmatprep.subr.mxu0 0.0
        %394 = vmatpush1.msra.mxu0 0.0
        %395 = vmatprep.subr.mxu0 0.0
        %396 = vmatpush1.msra.mxu0 0.0
        %397 = vmatprep.subr.mxu0 0.0
        %398 = vmatpush1.msra.mxu0 0.0
        %399 = vmatprep.subr.mxu0 0.0
        %400 = vmatpush1.msra.mxu0 0.0
        %401 = vmatprep.subr.mxu0 0.0
        %402 = vmatpush1.msra.mxu0 0.0
        %403 = vmatprep.subr.mxu0 0.0
        %404 = vmatpush1.msra.mxu0 0.0
        %405 = vmatprep.subr.mxu0 0.0
        %406 = vmatpush1.msra.mxu0 0.0
        %407 = vmatprep.subr.mxu0 0.0
        %408 = vmatpush1.msra.mxu0 0.0
        %409 = vmatprep.subr.mxu0 0.0
        %410 = vmatpush1.msra.mxu0 0.0
        %411 = vmatprep.subr.mxu0 0.0
        %412 = vmatpush1.msra.mxu0 0.0
        %413 = vmatprep.subr.mxu0 0.0
        %414 = vmatpush1.msra.mxu0 0.0
        %415 = vmatprep.subr.mxu0 0.0
        %416 = vmatpush1.msra.mxu0 0.0
        %417 = vmatprep.subr.mxu0 0.0
        %418 = vmatpush1.msra.mxu0 0.0
        %419 = vmatprep.subr.mxu0 0.0
        %420 = vmatpush1.msra.mxu0 0.0
        %421 = vmatprep.subr.mxu0 0.0
        %422 = vmatpush1.msra.mxu0 0.0
        %423 = vmatprep.subr.mxu0 0.0
        %424 = vmatpush1.msra.mxu0 0.0
        %425 = vmatprep.mubr.f32.mxu0 0.0
        %426 = vmatmul.mubr.f32.gmra.mrb[0].mxu0 %v323
        %v427 = vpop.f32.mrb[0].mxu0
        %v428 = vadd.f32 %v319, %v427
        %v429 = vpop.f32.mrb[0].mxu0
        %430 = vmatprep.mubr.f32.mxu0 0.0
        %431 = vmatmul.mubr.f32.gmra.mrb[0].mxu0 %v326
        %v432 = vpop.f32.mrb[0].mxu0
        %v433 = vadd.f32 %v319, %v432
        %v434 = vpop.f32.mrb[0].mxu0
        %435 = vmatprep.mubr.f32.mxu0 0.0
        %436 = vmatmul.mubr.f32.gmra.mrb[0].mxu0 %v329
        %v437 = vpop.f32.mrb[0].mxu0
        %v438 = vadd.f32 %v319, %v437
        %v439 = vpop.f32.mrb[0].mxu0
        %440 = vmatprep.mubr.f32.mxu0 0.0
        %441 = vmatmul.mubr.f32.gmra.mrb[0].mxu0 %v332
        %v442 = vpop.f32.mrb[0].mxu0
        %v443 = vadd.f32 %v319, %v442
        %v444 = vpop.f32.mrb[0].mxu0
        %445 = vmatprep.mubr.f32.mxu0 0.0
        %446 = vmatmul.mubr.f32.gmra.mrb[0].mxu0 %v335
        %v447 = vpop.f32.mrb[0].mxu0
        %v448 = vadd.f32 %v319, %v447
        %v449 = vpop.f32.mrb[0].mxu0
        %450 = vmatprep.mubr.f32.mxu0 0.0
        %451 = vmatmul.mubr.f32.gmra.mrb[0].mxu0 %v338
        %v452 = vpop.f32.mrb[0].mxu0
        %v453 = vadd.f32 %v319, %v452
        %v454 = vpop.f32.mrb[0].mxu0
        %455 = vmatprep.mubr.f32.mxu0 0.0
        %456 = vmatmul.mubr.f32.gmra.mrb[0].mxu0 %v341
        %v457 = vpop.f32.mrb[0].mxu0
        %v458 = vadd.f32 %v319, %v457
        %v459 = vpop.f32.mrb[0].mxu0
        %460 = vmatprep.mubr.f32.mxu0 0.0
        %461 = vmatmul.mubr.f32.gmra.mrb[0].mxu0 %v344
        %v462 = vpop.f32.mrb[0].mxu0
        %v463 = vadd.f32 %v319, %v462
        %v464 = vpop.f32.mrb[0].mxu0
        %465 = vmatprep.mubr.f32.mxu0 0.0
        %466 = vmatmul.mubr.f32.gmra.mrb[0].mxu0 %v347
        %v467 = vpop.f32.mrb[0].mxu0
        %v468 = vadd.f32 %v319, %v467
        %v469 = vpop.f32.mrb[0].mxu0
        %470 = vmatprep.mubr.f32.mxu0 0.0
        %471 = vmatmul.mubr.f32.gmra.mrb[0].mxu0 %v350
        %v472 = vpop.f32.mrb[0].mxu0
        %v473 = vadd.f32 %v319, %v472
        %v474 = vpop.f32.mrb[0].mxu0
        %475 = vmatprep.mubr.f32.mxu0 0.0
        %476 = vmatmul.mubr.f32.gmra.mrb[0].mxu0 %v353
        %v477 = vpop.f32.mrb[0].mxu0
        %v478 = vadd.f32 %v319, %v477
        %v479 = vpop.f32.mrb[0].mxu0
        %480 = vmatprep.mubr.f32.mxu0 0.0
        %481 = vmatmul.mubr.f32.gmra.mrb[0].mxu0 %v356
        %v482 = vpop.f32.mrb[0].mxu0
        %v483 = vadd.f32 %v319, %v482
        %v484 = vpop.f32.mrb[0].mxu0
        %485 = vmatprep.mubr.f32.mxu0 0.0
        %486 = vmatmul.mubr.f32.gmra.mrb[0].mxu0 %v359
        %v487 = vpop.f32.mrb[0].mxu0
        %v488 = vadd.f32 %v319, %v487
        %v489 = vpop.f32.mrb[0].mxu0
        %490 = vdwg.mxu0
        %v491 = vmax.f32 %v428, 0.0
        %v492 = vmax.f32 %v433, 0.0
        %v493 = vmax.f32 %v438, 0.0
        %v494 = vmax.f32 %v443, 0.0
        %v495 = vmax.f32 %v448, 0.0
        %v496 = vmax.f32 %v453, 0.0
        %v497 = vmax.f32 %v458, 0.0
        %v498 = vmax.f32 %v463, 0.0
        %v499 = vmax.f32 %v468, 0.0
        %v500 = vmax.f32 %v473, 0.0
        %v501 = vmax.f32 %v478, 0.0
        %v502 = vmax.f32 %v483, 0.0
        %v503 = vmax.f32 %v488, 0.0
        %v504 = vld [vmem:[%s3] sm:$0xff]
        %v505 = vld [vmem:[%s3 + $0x8] sm:$0xff]
        %v506 = vld [vmem:[%s3 + $0x10] sm:$0xff]
        %v507 = vld [vmem:[%s3 + $0x18] sm:$0xff]
        %v508 = vld [vmem:[%s3 + $0x20] sm:$0xff]
        %v509 = vld [vmem:[%s3 + $0x28] sm:$0xff]
        %v510 = vld [vmem:[%s3 + $0x30] sm:$0xff]
        %v511 = vld [vmem:[%s3 + $0x38] sm:$0xff]
        %v512 = vld [vmem:[%s3 + $0x40] sm:$0xff]
        %v513 = vld [vmem:[%s3 + $0x48] sm:$0xff]
        %v514 = vld [vmem:[%s3 + $0x50] sm:$0xff]
        %v515 = vld [vmem:[%s3 + $0x58] sm:$0xff]
        %v516 = vld [vmem:[%s3 + $0x60] sm:$0xff]
        %v517 = vld [vmem:[%s3 + $0x68] sm:$0xff]
        %v518 = vld [vmem:[%s3 + $0x70] sm:$0xff]
        %v519 = vld [vmem:[%s3 + $0x78] sm:$0xff]
        %v520 = vld [vmem:[%s4] sm:$0x1]
        %v522 = vlaneseq
        %v523 = vshrl.u32 %v522, 7
        %v524 = vsub.s32 0, %v523
        %v525 = vrot.slane %v520, %v524
        %527 = vmatprep.subr.mxu0 0.0
        %528 = vmatpush1.msra.mxu0 %v504
        %529 = vmatprep.subr.mxu0 0.0
        %530 = vmatpush1.msra.mxu0 %v505
        %531 = vmatprep.subr.mxu0 0.0
        %532 = vmatpush1.msra.mxu0 %v506
        %533 = vmatprep.subr.mxu0 0.0
        %534 = vmatpush1.msra.mxu0 %v507
        %535 = vmatprep.subr.mxu0 0.0
        %536 = vmatpush1.msra.mxu0 %v508
        %537 = vmatprep.subr.mxu0 0.0
        %538 = vmatpush1.msra.mxu0 %v509
        %539 = vmatprep.subr.mxu0 0.0
        %540 = vmatpush1.msra.mxu0 %v510
        %541 = vmatprep.subr.mxu0 0.0
        %542 = vmatpush1.msra.mxu0 %v511
        %543 = vmatprep.subr.mxu0 0.0
        %544 = vmatpush1.msra.mxu0 %v512
        %545 = vmatprep.subr.mxu0 0.0
        %546 = vmatpush1.msra.mxu0 %v513
        %547 = vmatprep.subr.mxu0 0.0
        %548 = vmatpush1.msra.mxu0 %v514
        %549 = vmatprep.subr.mxu0 0.0
        %550 = vmatpush1.msra.mxu0 %v515
        %551 = vmatprep.subr.mxu0 0.0
        %552 = vmatpush1.msra.mxu0 %v516
        %553 = vmatprep.subr.mxu0 0.0
        %554 = vmatpush1.msra.mxu0 %v517
        %555 = vmatprep.subr.mxu0 0.0
        %556 = vmatpush1.msra.mxu0 %v518
        %557 = vmatprep.subr.mxu0 0.0
        %558 = vmatpush1.msra.mxu0 %v519
        %559 = vmatprep.subr.mxu0 0.0
        %560 = vmatpush1.msra.mxu0 0.0
        %561 = vmatprep.subr.mxu0 0.0
        %562 = vmatpush1.msra.mxu0 0.0
        %563 = vmatprep.subr.mxu0 0.0
        %564 = vmatpush1.msra.mxu0 0.0
        %565 = vmatprep.subr.mxu0 0.0
        %566 = vmatpush1.msra.mxu0 0.0
        %567 = vmatprep.subr.mxu0 0.0
        %568 = vmatpush1.msra.mxu0 0.0
        %569 = vmatprep.subr.mxu0 0.0
        %570 = vmatpush1.msra.mxu0 0.0
        %571 = vmatprep.subr.mxu0 0.0
        %572 = vmatpush1.msra.mxu0 0.0
        %573 = vmatprep.subr.mxu0 0.0
        %574 = vmatpush1.msra.mxu0 0.0
        %575 = vmatprep.subr.mxu0 0.0
        %576 = vmatpush1.msra.mxu0 0.0
        %577 = vmatprep.subr.mxu0 0.0
        %578 = vmatpush1.msra.mxu0 0.0
        %579 = vmatprep.subr.mxu0 0.0
        %580 = vmatpush1.msra.mxu0 0.0
        %581 = vmatprep.subr.mxu0 0.0
        %582 = vmatpush1.msra.mxu0 0.0
        %583 = vmatprep.subr.mxu0 0.0
        %584 = vmatpush1.msra.mxu0 0.0
        %585 = vmatprep.subr.mxu0 0.0
        %586 = vmatpush1.msra.mxu0 0.0
        %587 = vmatprep.subr.mxu0 0.0
        %588 = vmatpush1.msra.mxu0 0.0
        %589 = vmatprep.subr.mxu0 0.0
        %590 = vmatpush1.msra.mxu0 0.0
        %591 = vmatprep.mubr.f32.mxu0 0.0
        %592 = vmatmul.mubr.f32.gmra.mrb[0].mxu0 %v491
        %v593 = vpop.f32.mrb[0].mxu0
        %v594 = vadd.f32 %v525, %v593
        %v595 = vpop.f32.mrb[0].mxu0
        %596 = vmatprep.mubr.f32.mxu0 0.0
        %597 = vmatmul.mubr.f32.gmra.mrb[0].mxu0 %v492
        %v598 = vpop.f32.mrb[0].mxu0
        %v599 = vadd.f32 %v525, %v598
        %v600 = vpop.f32.mrb[0].mxu0
        %601 = vmatprep.mubr.f32.mxu0 0.0
        %602 = vmatmul.mubr.f32.gmra.mrb[0].mxu0 %v493
        %v603 = vpop.f32.mrb[0].mxu0
        %v604 = vadd.f32 %v525, %v603
        %v605 = vpop.f32.mrb[0].mxu0
        %606 = vmatprep.mubr.f32.mxu0 0.0
        %607 = vmatmul.mubr.f32.gmra.mrb[0].mxu0 %v494
        %v608 = vpop.f32.mrb[0].mxu0
        %v609 = vadd.f32 %v525, %v608
        %v610 = vpop.f32.mrb[0].mxu0
        %611 = vmatprep.mubr.f32.mxu0 0.0
        %612 = vmatmul.mubr.f32.gmra.mrb[0].mxu0 %v495
        %v613 = vpop.f32.mrb[0].mxu0
        %v614 = vadd.f32 %v525, %v613
        %v615 = vpop.f32.mrb[0].mxu0
        %616 = vmatprep.mubr.f32.mxu0 0.0
        %617 = vmatmul.mubr.f32.gmra.mrb[0].mxu0 %v496
        %v618 = vpop.f32.mrb[0].mxu0
        %v619 = vadd.f32 %v525, %v618
        %v620 = vpop.f32.mrb[0].mxu0
        %621 = vmatprep.mubr.f32.mxu0 0.0
        %622 = vmatmul.mubr.f32.gmra.mrb[0].mxu0 %v497
        %v623 = vpop.f32.mrb[0].mxu0
        %v624 = vadd.f32 %v525, %v623
        %v625 = vpop.f32.mrb[0].mxu0
        %626 = vmatprep.mubr.f32.mxu0 0.0
        %627 = vmatmul.mubr.f32.gmra.mrb[0].mxu0 %v498
        %v628 = vpop.f32.mrb[0].mxu0
        %v629 = vadd.f32 %v525, %v628
        %v630 = vpop.f32.mrb[0].mxu0
        %631 = vmatprep.mubr.f32.mxu0 0.0
        %632 = vmatmul.mubr.f32.gmra.mrb[0].mxu0 %v499
        %v633 = vpop.f32.mrb[0].mxu0
        %v634 = vadd.f32 %v525, %v633
        %v635 = vpop.f32.mrb[0].mxu0
        %636 = vmatprep.mubr.f32.mxu0 0.0
        %637 = vmatmul.mubr.f32.gmra.mrb[0].mxu0 %v500
        %v638 = vpop.f32.mrb[0].mxu0
        %v639 = vadd.f32 %v525, %v638
        %v640 = vpop.f32.mrb[0].mxu0
        %641 = vmatprep.mubr.f32.mxu0 0.0
        %642 = vmatmul.mubr.f32.gmra.mrb[0].mxu0 %v501
        %v643 = vpop.f32.mrb[0].mxu0
        %v644 = vadd.f32 %v525, %v643
        %v645 = vpop.f32.mrb[0].mxu0
        %646 = vmatprep.mubr.f32.mxu0 0.0
        %647 = vmatmul.mubr.f32.gmra.mrb[0].mxu0 %v502
        %v648 = vpop.f32.mrb[0].mxu0
        %v649 = vadd.f32 %v525, %v648
        %v650 = vpop.f32.mrb[0].mxu0
        %651 = vmatprep.mubr.f32.mxu0 0.0
        %652 = vmatmul.mubr.f32.gmra.mrb[0].mxu0 %v503
        %v653 = vpop.f32.mrb[0].mxu0
        %v654 = vadd.f32 %v525, %v653
        %v655 = vpop.f32.mrb[0].mxu0
        %656 = vdwg.mxu0
        %v657 = vmax.f32 %v594, 0.0
        %v658 = vmax.f32 %v599, 0.0
        %v659 = vmax.f32 %v604, 0.0
        %v660 = vmax.f32 %v609, 0.0
        %v661 = vmax.f32 %v614, 0.0
        %v662 = vmax.f32 %v619, 0.0
        %v663 = vmax.f32 %v624, 0.0
        %v664 = vmax.f32 %v629, 0.0
        %v665 = vmax.f32 %v634, 0.0
        %v666 = vmax.f32 %v639, 0.0
        %v667 = vmax.f32 %v644, 0.0
        %v668 = vmax.f32 %v649, 0.0
        %v669 = vmax.f32 %v654, 0.0
        %v670 = vld [vmem:[%s5] sm:$0xff]
        %v671 = vld [vmem:[%s5 + $0x8] sm:$0xff]
        %v672 = vld [vmem:[%s5 + $0x10] sm:$0xff]
        %v673 = vld [vmem:[%s5 + $0x18] sm:$0xff]
        %v674 = vld [vmem:[%s5 + $0x20] sm:$0xff]
        %v675 = vld [vmem:[%s5 + $0x28] sm:$0xff]
        %v676 = vld [vmem:[%s5 + $0x30] sm:$0xff]
        %v677 = vld [vmem:[%s5 + $0x38] sm:$0xff]
        %v678 = vld [vmem:[%s5 + $0x40] sm:$0xff]
        %v679 = vld [vmem:[%s5 + $0x48] sm:$0xff]
        %v680 = vld [vmem:[%s5 + $0x50] sm:$0xff]
        %v681 = vld [vmem:[%s5 + $0x58] sm:$0xff]
        %v682 = vld [vmem:[%s5 + $0x60] sm:$0xff]
        %v683 = vld [vmem:[%s5 + $0x68] sm:$0xff]
        %v684 = vld [vmem:[%s5 + $0x70] sm:$0xff]
        %v685 = vld [vmem:[%s5 + $0x78] sm:$0xff]
        %v686 = vld [vmem:[%s6] sm:$0x1]
        %v688 = vlaneseq
        %v689 = vshrl.u32 %v688, 7
        %v690 = vsub.s32 0, %v689
        %v691 = vrot.slane %v686, %v690
        %693 = vmatprep.subr.mxu0 0.0
        %694 = vmatpush1.msra.mxu0 %v670
        %695 = vmatprep.subr.mxu0 0.0
        %696 = vmatpush1.msra.mxu0 %v671
        %697 = vmatprep.subr.mxu0 0.0
        %698 = vmatpush1.msra.mxu0 %v672
        %699 = vmatprep.subr.mxu0 0.0
        %700 = vmatpush1.msra.mxu0 %v673
        %701 = vmatprep.subr.mxu0 0.0
        %702 = vmatpush1.msra.mxu0 %v674
        %703 = vmatprep.subr.mxu0 0.0
        %704 = vmatpush1.msra.mxu0 %v675
        %705 = vmatprep.subr.mxu0 0.0
        %706 = vmatpush1.msra.mxu0 %v676
        %707 = vmatprep.subr.mxu0 0.0
        %708 = vmatpush1.msra.mxu0 %v677
        %709 = vmatprep.subr.mxu0 0.0
        %710 = vmatpush1.msra.mxu0 %v678
        %711 = vmatprep.subr.mxu0 0.0
        %712 = vmatpush1.msra.mxu0 %v679
        %713 = vmatprep.subr.mxu0 0.0
        %714 = vmatpush1.msra.mxu0 %v680
        %715 = vmatprep.subr.mxu0 0.0
        %716 = vmatpush1.msra.mxu0 %v681
        %717 = vmatprep.subr.mxu0 0.0
        %718 = vmatpush1.msra.mxu0 %v682
        %719 = vmatprep.subr.mxu0 0.0
        %720 = vmatpush1.msra.mxu0 %v683
        %721 = vmatprep.subr.mxu0 0.0
        %722 = vmatpush1.msra.mxu0 %v684
        %723 = vmatprep.subr.mxu0 0.0
        %724 = vmatpush1.msra.mxu0 %v685
        %725 = vmatprep.subr.mxu0 0.0
        %726 = vmatpush1.msra.mxu0 0.0
        %727 = vmatprep.subr.mxu0 0.0
        %728 = vmatpush1.msra.mxu0 0.0
        %729 = vmatprep.subr.mxu0 0.0
        %730 = vmatpush1.msra.mxu0 0.0
        %731 = vmatprep.subr.mxu0 0.0
        %732 = vmatpush1.msra.mxu0 0.0
        %733 = vmatprep.subr.mxu0 0.0
        %734 = vmatpush1.msra.mxu0 0.0
        %735 = vmatprep.subr.mxu0 0.0
        %736 = vmatpush1.msra.mxu0 0.0
        %737 = vmatprep.subr.mxu0 0.0
        %738 = vmatpush1.msra.mxu0 0.0
        %739 = vmatprep.subr.mxu0 0.0
        %740 = vmatpush1.msra.mxu0 0.0
        %741 = vmatprep.subr.mxu0 0.0
        %742 = vmatpush1.msra.mxu0 0.0
        %743 = vmatprep.subr.mxu0 0.0
        %744 = vmatpush1.msra.mxu0 0.0
        %745 = vmatprep.subr.mxu0 0.0
        %746 = vmatpush1.msra.mxu0 0.0
        %747 = vmatprep.subr.mxu0 0.0
        %748 = vmatpush1.msra.mxu0 0.0
        %749 = vmatprep.subr.mxu0 0.0
        %750 = vmatpush1.msra.mxu0 0.0
        %751 = vmatprep.subr.mxu0 0.0
        %752 = vmatpush1.msra.mxu0 0.0
        %753 = vmatprep.subr.mxu0 0.0
        %754 = vmatpush1.msra.mxu0 0.0
        %755 = vmatprep.subr.mxu0 0.0
        %756 = vmatpush1.msra.mxu0 0.0
        %757 = vmatprep.mubr.f32.mxu0 0.0
        %758 = vmatmul.mubr.f32.gmra.mrb[0].mxu0 %v657
        %v759 = vpop.f32.mrb[0].mxu0
        %v760 = vadd.f32 %v691, %v759
        %v761 = vpop.f32.mrb[0].mxu0
        %762 = vmatprep.mubr.f32.mxu0 0.0
        %763 = vmatmul.mubr.f32.gmra.mrb[0].mxu0 %v658
        %v764 = vpop.f32.mrb[0].mxu0
        %v765 = vadd.f32 %v691, %v764
        %v766 = vpop.f32.mrb[0].mxu0
        %767 = vmatprep.mubr.f32.mxu0 0.0
        %768 = vmatmul.mubr.f32.gmra.mrb[0].mxu0 %v659
        %v769 = vpop.f32.mrb[0].mxu0
        %v770 = vadd.f32 %v691, %v769
        %v771 = vpop.f32.mrb[0].mxu0
        %772 = vmatprep.mubr.f32.mxu0 0.0
        %773 = vmatmul.mubr.f32.gmra.mrb[0].mxu0 %v660
        %v774 = vpop.f32.mrb[0].mxu0
        %v775 = vadd.f32 %v691, %v774
        %v776 = vpop.f32.mrb[0].mxu0
        %777 = vmatprep.mubr.f32.mxu0 0.0
        %778 = vmatmul.mubr.f32.gmra.mrb[0].mxu0 %v661
        %v779 = vpop.f32.mrb[0].mxu0
        %v780 = vadd.f32 %v691, %v779
        %v781 = vpop.f32.mrb[0].mxu0
        %782 = vmatprep.mubr.f32.mxu0 0.0
        %783 = vmatmul.mubr.f32.gmra.mrb[0].mxu0 %v662
        %v784 = vpop.f32.mrb[0].mxu0
        %v785 = vadd.f32 %v691, %v784
        %v786 = vpop.f32.mrb[0].mxu0
        %787 = vmatprep.mubr.f32.mxu0 0.0
        %788 = vmatmul.mubr.f32.gmra.mrb[0].mxu0 %v663
        %v789 = vpop.f32.mrb[0].mxu0
        %v790 = vadd.f32 %v691, %v789
        %v791 = vpop.f32.mrb[0].mxu0
        %792 = vmatprep.mubr.f32.mxu0 0.0
        %793 = vmatmul.mubr.f32.gmra.mrb[0].mxu0 %v664
        %v794 = vpop.f32.mrb[0].mxu0
        %v795 = vadd.f32 %v691, %v794
        %v796 = vpop.f32.mrb[0].mxu0
        %797 = vmatprep.mubr.f32.mxu0 0.0
        %798 = vmatmul.mubr.f32.gmra.mrb[0].mxu0 %v665
        %v799 = vpop.f32.mrb[0].mxu0
        %v800 = vadd.f32 %v691, %v799
        %v801 = vpop.f32.mrb[0].mxu0
        %802 = vmatprep.mubr.f32.mxu0 0.0
        %803 = vmatmul.mubr.f32.gmra.mrb[0].mxu0 %v666
        %v804 = vpop.f32.mrb[0].mxu0
        %v805 = vadd.f32 %v691, %v804
        %v806 = vpop.f32.mrb[0].mxu0
        %807 = vmatprep.mubr.f32.mxu0 0.0
        %808 = vmatmul.mubr.f32.gmra.mrb[0].mxu0 %v667
        %v809 = vpop.f32.mrb[0].mxu0
        %v810 = vadd.f32 %v691, %v809
        %v811 = vpop.f32.mrb[0].mxu0
        %812 = vmatprep.mubr.f32.mxu0 0.0
        %813 = vmatmul.mubr.f32.gmra.mrb[0].mxu0 %v668
        %v814 = vpop.f32.mrb[0].mxu0
        %v815 = vadd.f32 %v691, %v814
        %v816 = vpop.f32.mrb[0].mxu0
        %817 = vmatprep.mubr.f32.mxu0 0.0
        %818 = vmatmul.mubr.f32.gmra.mrb[0].mxu0 %v669
        %v819 = vpop.f32.mrb[0].mxu0
        %v820 = vadd.f32 %v691, %v819
        %v821 = vpop.f32.mrb[0].mxu0
        %822 = vdwg.mxu0
        %vm823 = vcmask 130048
        %824 = vst.msk [vmem:[%s280] sm:$0xff] %vm823, %v760
        %825 = vst.msk [vmem:[%s280 + $0x8] sm:$0xff] %vm823, %v765
        %826 = vst.msk [vmem:[%s280 + $0x10] sm:$0xff] %vm823, %v770
        %827 = vst.msk [vmem:[%s280 + $0x18] sm:$0xff] %vm823, %v775
        %828 = vst.msk [vmem:[%s280 + $0x20] sm:$0xff] %vm823, %v780
        %829 = vst.msk [vmem:[%s280 + $0x28] sm:$0xff] %vm823, %v785
        %830 = vst.msk [vmem:[%s280 + $0x30] sm:$0xff] %vm823, %v790
        %831 = vst.msk [vmem:[%s280 + $0x38] sm:$0xff] %vm823, %v795
        %832 = vst.msk [vmem:[%s280 + $0x40] sm:$0xff] %vm823, %v800
        %833 = vst.msk [vmem:[%s280 + $0x48] sm:$0xff] %vm823, %v805
        %834 = vst.msk [vmem:[%s280 + $0x50] sm:$0xff] %vm823, %v810
        %835 = vst.msk [vmem:[%s280 + $0x58] sm:$0xff] %vm823, %v815
        %836 = vst.msk [vmem:[%s280 + $0x60] sm:$0xff] %vm823, %v820
        %s837 = sand.u32 %s178, 1
        %s838 = sand.u32 %s178, 1
        %s839 = smul.addr %s838, 104
        %s840 = scalar_lea.vmem [#allocation2], %s839
        // Predicated region
        $region49: #{decoder_forward.1} parent=47 // pred_check
          %p841 = pneg %p188
        $region50: #{decoder_forward.1} parent=47 // pred_check_branch
          %843 = sbr.rel (%p841) target = $region52
        $region51: #{decoder_forward.1} parent=47 // pred_region
          %s844 = smul.u32 13, %s18
          %s845 = ssub.s32 38, %s844
          %p846 = scmp.lt.s32.totalorder %s845, 13
          %s847 = scalar_select %p846, %s845, 13
          %s848 = smul.u32 128, %s847
          %p849 = scmp.ne.s32.totalorder 0, %s848
          %s850 = smul.addr %s844, 8
          %s851 = scalar_lea.vmem %s7, %s850
          // Predicated region
          $region53: #{decoder_forward.1} parent=51 // pred_check
            %p852 = pneg %p849
          $region54: #{decoder_forward.1} parent=51 // pred_check_branch
            %854 = sbr.rel (%p852) target = $region56
          $region55: #{decoder_forward.1} parent=51 // pred_region
            // Predicated region
            $region57: #{decoder_forward.1} parent=55 // pred_check
              _
            $region58: #{decoder_forward.1} parent=55 // pred_check_branch
              %856 = sbr.rel (0) target = $region60
            $region59: #{decoder_forward.1} parent=55 // pred_region
              // Predicated region
              $region79: #{decoder_forward.1} parent=59 // pred_check
                _
              $region80: #{decoder_forward.1} parent=59 // pred_check_branch
                %930 = sbr.rel (0) target = $region82
              $region81: #{decoder_forward.1} parent=59 // pred_region
                %s931 = sdiv.u32.pop %s847, 13
                %s932 = srem.u32.pop %s847, 13
                // While loop
                $region83: #{decoder_forward.1} parent=81 // loop_pre_header
                  _
                $region84: #{decoder_forward.1} parent=81 // loop_header
                  %s934 = sphi 0, %s936
                  %p935 = scmp.ge.s32.totalorder %s934, %s931
                  %s939 = sphi 0, %s970
                  %s940 = sphi %s840, %s973
                  %s941 = sphi %s851, %s974
                $region85: #{decoder_forward.1} parent=81 // loop_header_branch
                  %938 = sbr.rel (%p935) target = $region89
                $region86: #{decoder_forward.1} parent=81 // loop_body
                  %v942 = vld [vmem:[%s940] sm:$0xff]
                  %943 = vst [vmem:[%s941] sm:$0xff] %v942
                  %v944 = vld [vmem:[%s940 + $0x8] sm:$0xff]
                  %945 = vst [vmem:[%s941 + $0x8] sm:$0xff] %v944
                  %v946 = vld [vmem:[%s940 + $0x10] sm:$0xff]
                  %947 = vst [vmem:[%s941 + $0x10] sm:$0xff] %v946
                  %v948 = vld [vmem:[%s940 + $0x18] sm:$0xff]
                  %949 = vst [vmem:[%s941 + $0x18] sm:$0xff] %v948
                  %v950 = vld [vmem:[%s940 + $0x20] sm:$0xff]
                  %951 = vst [vmem:[%s941 + $0x20] sm:$0xff] %v950
                  %v952 = vld [vmem:[%s940 + $0x28] sm:$0xff]
                  %953 = vst [vmem:[%s941 + $0x28] sm:$0xff] %v952
                  %v954 = vld [vmem:[%s940 + $0x30] sm:$0xff]
                  %955 = vst [vmem:[%s941 + $0x30] sm:$0xff] %v954
                  %v956 = vld [vmem:[%s940 + $0x38] sm:$0xff]
                  %957 = vst [vmem:[%s941 + $0x38] sm:$0xff] %v956
                  %v958 = vld [vmem:[%s940 + $0x40] sm:$0xff]
                  %959 = vst [vmem:[%s941 + $0x40] sm:$0xff] %v958
                  %v960 = vld [vmem:[%s940 + $0x48] sm:$0xff]
                  %961 = vst [vmem:[%s941 + $0x48] sm:$0xff] %v960
                  %v962 = vld [vmem:[%s940 + $0x50] sm:$0xff]
                  %963 = vst [vmem:[%s941 + $0x50] sm:$0xff] %v962
                  %v964 = vld [vmem:[%s940 + $0x58] sm:$0xff]
                  %965 = vst [vmem:[%s941 + $0x58] sm:$0xff] %v964
                  %v966 = vld [vmem:[%s940 + $0x60] sm:$0xff]
                  %967 = vst [vmem:[%s941 + $0x60] sm:$0xff] %v966
                  %s968 = sadd.s32 1, %s939
                  %p969 = scmp.ge.s32.totalorder %s968, %s931
                  %s970 = scalar_select %p969, 0, %s968
                  %s971 = smul.u32 %s970, 104
                  %s972 = smul.u32 %s970, 104
                  %s973 = scalar_lea.vmem %s840, %s971 [#allocation2]
                  %s974 = scalar_lea.vmem %s851, %s972
                $region87: #{decoder_forward.1} parent=81 // loop_footer
                  %s936 = sadd.s32 %s934, 1
                $region88: #{decoder_forward.1} parent=81 // loop_footer_branch
                  %933 = sbr.rel target = $region84
                $region89: #{decoder_forward.1} parent=81 // loop_exit
                  _
                %s975 = sdiv.u32.pop %s847, 13
                %s976 = srem.u32.pop %s847, 13
                %s977 = smul.u32 %s975, 13
                %s978 = smul.u32 8, %s977
                %s979 = scalar_lea.vmem %s840, %s978 [#allocation2]
                %s980 = smul.u32 8, %s977
                %s981 = scalar_lea.vmem %s851, %s980
                // While loop
                $region90: #{decoder_forward.1} parent=81 // loop_pre_header
                  _
                $region91: #{decoder_forward.1} parent=81 // loop_header
                  %s983 = sphi 0, %s985
                  %p984 = scmp.ge.s32.totalorder %s983, %s976
                  %s988 = sphi 0, %s995
                  %s989 = sphi %s979, %s998
                  %s990 = sphi %s981, %s999
                $region92: #{decoder_forward.1} parent=81 // loop_header_branch
                  %987 = sbr.rel (%p984) target = $region96
                $region93: #{decoder_forward.1} parent=81 // loop_body
                  %v991 = vld [vmem:[%s989] sm:$0xff]
                  %992 = vst [vmem:[%s990] sm:$0xff] %v991
                  %s993 = sadd.s32 1, %s988
                  %p994 = scmp.ge.s32.totalorder %s993, %s976
                  %s995 = scalar_select %p994, 0, %s993
                  %s996 = smul.u32 %s995, 8
                  %s997 = smul.u32 %s995, 8
                  %s998 = scalar_lea.vmem %s979, %s996 [#allocation2]
                  %s999 = scalar_lea.vmem %s981, %s997
                $region94: #{decoder_forward.1} parent=81 // loop_footer
                  %s985 = sadd.s32 %s983, 1
                $region95: #{decoder_forward.1} parent=81 // loop_footer_branch
                  %982 = sbr.rel target = $region91
                $region96: #{decoder_forward.1} parent=81 // loop_exit
                  _
              $region82: #{decoder_forward.1} parent=59 // pred_fallthru
                _
              // Predicated region
              $region97: #{decoder_forward.1} parent=59 // pred_check
                _
              $region98: #{decoder_forward.1} parent=59 // pred_check_branch
                %1001 = sbr.rel target = $region100
              $region99: #{decoder_forward.1} parent=59 // pred_region
                _
              $region100: #{decoder_forward.1} parent=59 // pred_fallthru
                _
            $region60: #{decoder_forward.1} parent=55 // pred_fallthru
              _
            // Predicated region
            $region61: #{decoder_forward.1} parent=55 // pred_check
              _
            $region62: #{decoder_forward.1} parent=55 // pred_check_branch
              %858 = sbr.rel target = $region64
            $region63: #{decoder_forward.1} parent=55 // pred_region
              %s860 = sdiv.u32.pop %s847, 13
              %s861 = srem.u32.pop %s847, 13
              // While loop
              $region65: #{decoder_forward.1} parent=63 // loop_pre_header
                _
              $region66: #{decoder_forward.1} parent=63 // loop_header
                %s863 = sphi 0, %s865
                %p864 = scmp.ge.s32.totalorder %s863, %s860
                %s868 = sphi 0, %s899
                %s869 = sphi %s840, %s902
                %s870 = sphi %s851, %s903
              $region67: #{decoder_forward.1} parent=63 // loop_header_branch
                %867 = sbr.rel (%p864) target = $region71
              $region68: #{decoder_forward.1} parent=63 // loop_body
                %v871 = vld [vmem:[%s869] sm:$0xff]
                %872 = vst [vmem:[%s870] sm:$0xff] %v871
                %v873 = vld [vmem:[%s869 + $0x8] sm:$0xff]
                %874 = vst [vmem:[%s870 + $0x8] sm:$0xff] %v873
                %v875 = vld [vmem:[%s869 + $0x10] sm:$0xff]
                %876 = vst [vmem:[%s870 + $0x10] sm:$0xff] %v875
                %v877 = vld [vmem:[%s869 + $0x18] sm:$0xff]
                %878 = vst [vmem:[%s870 + $0x18] sm:$0xff] %v877
                %v879 = vld [vmem:[%s869 + $0x20] sm:$0xff]
                %880 = vst [vmem:[%s870 + $0x20] sm:$0xff] %v879
                %v881 = vld [vmem:[%s869 + $0x28] sm:$0xff]
                %882 = vst [vmem:[%s870 + $0x28] sm:$0xff] %v881
                %v883 = vld [vmem:[%s869 + $0x30] sm:$0xff]
                %884 = vst [vmem:[%s870 + $0x30] sm:$0xff] %v883
                %v885 = vld [vmem:[%s869 + $0x38] sm:$0xff]
                %886 = vst [vmem:[%s870 + $0x38] sm:$0xff] %v885
                %v887 = vld [vmem:[%s869 + $0x40] sm:$0xff]
                %888 = vst [vmem:[%s870 + $0x40] sm:$0xff] %v887
                %v889 = vld [vmem:[%s869 + $0x48] sm:$0xff]
                %890 = vst [vmem:[%s870 + $0x48] sm:$0xff] %v889
                %v891 = vld [vmem:[%s869 + $0x50] sm:$0xff]
                %892 = vst [vmem:[%s870 + $0x50] sm:$0xff] %v891
                %v893 = vld [vmem:[%s869 + $0x58] sm:$0xff]
                %894 = vst [vmem:[%s870 + $0x58] sm:$0xff] %v893
                %v895 = vld [vmem:[%s869 + $0x60] sm:$0xff]
                %896 = vst [vmem:[%s870 + $0x60] sm:$0xff] %v895
                %s897 = sadd.s32 1, %s868
                %p898 = scmp.ge.s32.totalorder %s897, %s860
                %s899 = scalar_select %p898, 0, %s897
                %s900 = smul.u32 %s899, 104
                %s901 = smul.u32 %s899, 104
                %s902 = scalar_lea.vmem %s840, %s900 [#allocation2]
                %s903 = scalar_lea.vmem %s851, %s901
              $region69: #{decoder_forward.1} parent=63 // loop_footer
                %s865 = sadd.s32 %s863, 1
              $region70: #{decoder_forward.1} parent=63 // loop_footer_branch
                %862 = sbr.rel target = $region66
              $region71: #{decoder_forward.1} parent=63 // loop_exit
                _
              %s904 = sdiv.u32.pop %s847, 13
              %s905 = srem.u32.pop %s847, 13
              %s906 = smul.u32 %s904, 13
              %s907 = smul.u32 8, %s906
              %s908 = scalar_lea.vmem %s840, %s907 [#allocation2]
              %s909 = smul.u32 8, %s906
              %s910 = scalar_lea.vmem %s851, %s909
              // While loop
              $region72: #{decoder_forward.1} parent=63 // loop_pre_header
                _
              $region73: #{decoder_forward.1} parent=63 // loop_header
                %s912 = sphi 0, %s914
                %p913 = scmp.ge.s32.totalorder %s912, %s905
                %s917 = sphi 0, %s924
                %s918 = sphi %s908, %s927
                %s919 = sphi %s910, %s928
              $region74: #{decoder_forward.1} parent=63 // loop_header_branch
                %916 = sbr.rel (%p913) target = $region78
              $region75: #{decoder_forward.1} parent=63 // loop_body
                %v920 = vld [vmem:[%s918] sm:$0xff]
                %921 = vst [vmem:[%s919] sm:$0xff] %v920
                %s922 = sadd.s32 1, %s917
                %p923 = scmp.ge.s32.totalorder %s922, %s905
                %s924 = scalar_select %p923, 0, %s922
                %s925 = smul.u32 %s924, 8
                %s926 = smul.u32 %s924, 8
                %s927 = scalar_lea.vmem %s908, %s925 [#allocation2]
                %s928 = scalar_lea.vmem %s910, %s926
              $region76: #{decoder_forward.1} parent=63 // loop_footer
                %s914 = sadd.s32 %s912, 1
              $region77: #{decoder_forward.1} parent=63 // loop_footer_branch
                %911 = sbr.rel target = $region73
              $region78: #{decoder_forward.1} parent=63 // loop_exit
                _
            $region64: #{decoder_forward.1} parent=55 // pred_fallthru
              _
          $region56: #{decoder_forward.1} parent=51 // pred_fallthru
            _
          %1002 = vnop
        $region52: #{decoder_forward.1} parent=47 // pred_fallthru
          _
      $region48: #{decoder_forward.1} parent=5 // pred_fallthru
        _
      %p1003 = scmp.le.s32.totalorder 2, %s13
      // Predicated region
      $region101: #{decoder_forward.1} parent=5 // pred_check
        %p1004 = pneg %p1003
      $region102: #{decoder_forward.1} parent=5 // pred_check_branch
        %1006 = sbr.rel (%p1004) target = $region104
      $region103: #{decoder_forward.1} parent=5 // pred_region
        %s1007 = ssub.s32 %s13, 2
        // Predicated region
        $region105: #{decoder_forward.1} parent=103 // pred_check
          %p1008 = pneg %p194
        $region106: #{decoder_forward.1} parent=103 // pred_check_branch
          %1010 = sbr.rel (%p1008) target = $region108
        $region107: #{decoder_forward.1} parent=103 // pred_region
          %s1011 = sand.u32 %s179, 1
          %s1012 = sand.u32 %s179, 1
          %s1013 = smul.addr %s1012, 104
          %s1014 = scalar_lea.vmem [#allocation2], %s1013
        $region108: #{decoder_forward.1} parent=103 // pred_fallthru
          _
      $region104: #{decoder_forward.1} parent=5 // pred_fallthru
        _
    $region6: #{decoder_forward.1} parent=1 // loop_footer
      %s17 = sadd.s32 1, %s13
    $region7: #{decoder_forward.1} parent=1 // loop_footer_branch
      %12 = sbr.rel target = $region3
    $region8: #{decoder_forward.1} parent=1 // loop_exit
      _

</llo_original>
